<compile_context>
chip_gen: v7x
topology: tpu7x:2x2x1
jax: 0.10.0
libtpu: 0.0.40
codegen_flags: <defaults>
</compile_context>

<pallas_src>
import jax
import jax.numpy as jnp
from jax.experimental import pallas as pl
from jax.experimental.pallas import tpu as pltpu


# ----------------------------------------------------------------------------
# Pallas kernel: one grid step = one independent batched graph.
# All operands resident in VMEM; 9 MXU matmuls + VPU/XLU work.
# ----------------------------------------------------------------------------
def _gcn_kernel(a_ref, p_ref, ws_ref, vecs_ref, out_ref):
    a = a_ref[...]                                     # (N, N) dense A_hat

    # ---- Layer 1 folded: A_hat @ (ones @ W1) == rowsum(A_hat) ⊗ W1 ----
    deg = jnp.sum(a, axis=1, keepdims=True)            # (N, 1)  XLU lane reduce
    w1 = vecs_ref[0:1, :]                              # (1, H)
    b1 = vecs_ref[1:2, :]                              # (1, H)
    h = jnp.maximum(deg * w1 + b1, 0.0)                # (N, H)  VPU

    # ---- Layers 2..5 (unrolled): relu(A_hat @ (h @ Wk) + bk) ----
    for k in range(4):
        w = ws_ref[k]                                  # (H, H)  static slice
        b = vecs_ref[k + 2:k + 3, :]                   # (1, H)  rows 2..5 = b2..b5
        hw = jnp.dot(h, w, preferred_element_type=jnp.float32)            # (N, H)
        h = jnp.maximum(
            jnp.dot(a, hw, preferred_element_type=jnp.float32) + b, 0.0)  # (N, H)
        # dropout(p=0.1, training=False) -> identity

    # ---- Head reassociated: (P @ h) @ W_lin == P @ (h @ W_lin) ----
    wl = vecs_ref[6:7, :]                              # (1, H)  = W_lin^T
    s = jnp.sum(h * wl, axis=-1, keepdims=True)        # (N, 1)  VPU mul + lane reduce
    pooled = jnp.dot(p_ref[...], s,
                     preferred_element_type=jnp.float32)                  # (G, 1)
    out_ref[...] = pooled + vecs_ref[7:8, 0:1]         # + b_lin (lane 0 of row 7)


# ----------------------------------------------------------------------------
# Wrapper: pack parameters, grid over the batch of independent graph-batches.
# ----------------------------------------------------------------------------
def pack_params(params):
    (w1, b1, w2, b2, w3, b3, w4, b4, w5, b5, w_lin, b_lin) = params
    hidden = w2.shape[0]
    ws = jnp.stack([w2, w3, w4, w5], axis=0)                      # (4, H, H)
    bl_row = jnp.zeros((hidden,), jnp.float32).at[0].set(b_lin.reshape(()))
    vecs = jnp.stack([
        w1.reshape(hidden),      # row 0: W1   (1, H)
        b1.reshape(hidden),      # row 1: b1
        b2.reshape(hidden),      # row 2: b2
        b3.reshape(hidden),      # row 3: b3
        b4.reshape(hidden),      # row 4: b4
        b5.reshape(hidden),      # row 5: b5
        w_lin.reshape(hidden),   # row 6: W_lin (H, 1) flattened
        bl_row,                  # row 7: b_lin in lane 0
    ], axis=0)                                                    # (8, H)
    return ws, vecs


def gcn_regression_forward(a_hat, pool_mat, params):
    """a_hat: (B, N, N) or (N, N) dense adjacency (self-loops included);
       pool_mat: (B, G, N) or (G, N) mean-pool matrices."""
    squeeze = a_hat.ndim == 2
    if squeeze:
        a_hat, pool_mat = a_hat[None], pool_mat[None]
    B, N, _ = a_hat.shape
    G = pool_mat.shape[1]
    ws, vecs = pack_params(params)
    H = ws.shape[-1]

    out = pl.pallas_call(
        _gcn_kernel,
        out_shape=jax.ShapeDtypeStruct((B, G, 1), jnp.float32),
        grid=(B,),
        in_specs=[
            pl.BlockSpec((None, N, N), lambda b: (b, 0, 0)),   # per-batch A_hat
            pl.BlockSpec((None, G, N), lambda b: (b, 0, 0)),   # per-batch pool matrix
            pl.BlockSpec((4, H, H), lambda b: (0, 0, 0)),      # shared stacked W2..W5
            pl.BlockSpec((8, H), lambda b: (0, 0)),            # shared packed vectors
        ],
        out_specs=pl.BlockSpec((None, G, 1), lambda b: (b, 0, 0)),
        compiler_params=pltpu.CompilerParams(
            dimension_semantics=("parallel",)),  # v7x: split batch across both TCs
        # NOTE: for large N, switch A to row-tiled BlockSpecs and raise
        # vmem_limit_bytes; at N=16 everything is trivially VMEM-resident.
    )(a_hat, pool_mat, ws, vecs)
    return out[0] if squeeze else out


# ----------------------------------------------------------------------------
# Glue: dense adjacency / mean-pool matrix construction + deterministic params.
# ----------------------------------------------------------------------------
def build_dense_adjacency(edge_index, edge_weight, num_nodes):
    src, dst = edge_index[0], edge_index[1]
    a = jnp.zeros((num_nodes, num_nodes), jnp.float32)
    # message passing: out[i] = sum_{e: j->i} w_e * x_j  =>  A[i, j] += w_e
    a = a.at[dst, src].add(edge_weight)
    # add_self_loops=True with fill value 1.0
    a = a + jnp.eye(num_nodes, dtype=jnp.float32)
    return a


def build_mean_pool_matrix(batch, num_graphs):
    onehot = (batch[None, :] == jnp.arange(num_graphs)[:, None]).astype(jnp.float32)
    counts = jnp.maximum(onehot.sum(axis=1, keepdims=True), 1.0)
    return onehot / counts                              # (G, N)


def init_params(key, hidden):
    keys = jax.random.split(key, 12)

    def glorot(k, shape):
        limit = jnp.sqrt(6.0 / (shape[0] + shape[1]))
        return jax.random.uniform(k, shape, jnp.float32, -limit, limit)

    w1 = glorot(keys[0], (1, hidden));      b1 = jnp.zeros((1, hidden), jnp.float32)
    w2 = glorot(keys[1], (hidden, hidden)); b2 = jnp.zeros((1, hidden), jnp.float32)
    w3 = glorot(keys[2], (hidden, hidden)); b3 = jnp.zeros((1, hidden), jnp.float32)
    w4 = glorot(keys[3], (hidden, hidden)); b4 = jnp.zeros((1, hidden), jnp.float32)
    w5 = glorot(keys[4], (hidden, hidden)); b5 = jnp.zeros((1, hidden), jnp.float32)
    w_lin = glorot(keys[5], (hidden, 1))
    b_lin = jax.random.uniform(keys[6], (1, 1), jnp.float32, -0.1, 0.1)
    return (w1, b1, w2, b2, w3, b3, w4, b4, w5, b5, w_lin, b_lin)


def reference_forward(a_hat, x0, params, pool_mat):
    """Pure-JAX reference in the original (un-reassociated) order."""
    (w1, b1, w2, b2, w3, b3, w4, b4, w5, b5, w_lin, b_lin) = params
    h = x0
    for w, b in ((w1, b1), (w2, b2), (w3, b3), (w4, b4), (w5, b5)):
        h = jnp.maximum(a_hat @ (h @ w) + b, 0.0)
    return (pool_mat @ h) @ w_lin + b_lin


if __name__ == "__main__":
    key = jax.random.PRNGKey(0)
    k_params, k_data = jax.random.split(key)

    num_nodes, num_edges, hidden = 16, 40, 32
    num_graphs, batch_size = 2, 2

    params = init_params(k_params, hidden)

    # Deterministic synthetic graph batches: random edges + random positive weights.
    a_list, p_list = [], []
    for dk in jax.random.split(k_data, batch_size):
        ke, kw = jax.random.split(dk)
        edge_index = jax.random.randint(ke, (2, num_edges), 0, num_nodes, jnp.int32)
        edge_weight = jax.random.uniform(kw, (num_edges,), jnp.float32, 0.1, 1.0)
        node_batch = jnp.concatenate([jnp.zeros(num_nodes // 2, jnp.int32),
                                      jnp.ones(num_nodes - num_nodes // 2, jnp.int32)])
        a_list.append(build_dense_adjacency(edge_index, edge_weight, num_nodes))
        p_list.append(build_mean_pool_matrix(node_batch, num_graphs))
    a_hat = jnp.stack(a_list)      # (B, N, N)
    pool_mat = jnp.stack(p_list)   # (B, G, N)

    out = gcn_regression_forward(a_hat, pool_mat, params)
    out = jax.block_until_ready(out)

    x0 = jnp.ones((num_nodes, 1), jnp.float32)
    ref = jnp.stack([reference_forward(a_hat[b], x0, params, pool_mat[b])
                     for b in range(batch_size)])

    assert out.shape == (batch_size, num_graphs, 1)
    assert jnp.allclose(out, ref, atol=1e-4, rtol=1e-4), (out, ref)
    print("KERNEL_OK")
</pallas_src>

<mosaic_0001>
module attributes {stable_mosaic.version = 11 : i64} {
  func.func @_gcn_kernel(%arg0: i32, %arg1: memref<1x16x16xf32, #tpu.memory_space<vmem>>, %arg2: memref<1x2x16xf32, #tpu.memory_space<vmem>>, %arg3: memref<4x32x32xf32, #tpu.memory_space<vmem>>, %arg4: memref<8x32xf32, #tpu.memory_space<vmem>>, %arg5: memref<1x2x1xf32, #tpu.memory_space<vmem>>) attributes {dimension_semantics = [#tpu.dimension_semantics<parallel>], iteration_bounds = array<i64: 2>, scalar_prefetch = 0 : i64, scratch_operands = 0 : i64, tpu.core_type = #tpu.core_type<tc>, window_params = [{transform_indices = @transform_0, window_bounds = array<i64: 1, 16, 16>}, {transform_indices = @transform_1, window_bounds = array<i64: 1, 2, 16>}, {pipeline_mode = #tpu.pipeline_mode<synchronous>, transform_indices = @transform_2, window_bounds = array<i64: 4, 32, 32>}, {pipeline_mode = #tpu.pipeline_mode<synchronous>, transform_indices = @transform_3, window_bounds = array<i64: 8, 32>}, {transform_indices = @transform_4, window_bounds = array<i64: 1, 2, 1>}]} {
    %c0 = arith.constant 0 : index
    %c0_0 = arith.constant 0 : index
    %c0_1 = arith.constant 0 : index
    %0 = vector.load %arg1[%c0, %c0_0, %c0_1] : memref<1x16x16xf32, #tpu.memory_space<vmem>>, vector<1x16x16xf32>
    %1 = vector.shape_cast %0 : vector<1x16x16xf32> to vector<16x16xf32>
    %cst = arith.constant dense<0.000000e+00> : vector<16xf32>
    %2 = vector.multi_reduction <add>, %1, %cst [1] : vector<16x16xf32> to vector<16xf32>
    %3 = vector.shape_cast %2 : vector<16xf32> to vector<16x1xf32>
    %c0_2 = arith.constant 0 : index
    %c0_3 = arith.constant 0 : index
    %4 = vector.load %arg4[%c0_2, %c0_3] : memref<8x32xf32, #tpu.memory_space<vmem>>, vector<1x32xf32>
    %c1 = arith.constant 1 : index
    %c0_4 = arith.constant 0 : index
    %5 = vector.load %arg4[%c1, %c0_4] : memref<8x32xf32, #tpu.memory_space<vmem>>, vector<1x32xf32>
    %6 = vector.broadcast %3 : vector<16x1xf32> to vector<16x32xf32>
    %7 = vector.broadcast %4 : vector<1x32xf32> to vector<16x32xf32>
    %8 = arith.mulf %6, %7 : vector<16x32xf32>
    %9 = vector.broadcast %5 : vector<1x32xf32> to vector<16x32xf32>
    %10 = arith.addf %8, %9 : vector<16x32xf32>
    %cst_5 = arith.constant 0.000000e+00 : f32
    %11 = vector.broadcast %cst_5 : f32 to vector<16x32xf32>
    %12 = arith.maximumf %10, %11 : vector<16x32xf32>
    %c0_6 = arith.constant 0 : index
    %c0_7 = arith.constant 0 : index
    %c0_8 = arith.constant 0 : index
    %13 = vector.load %arg3[%c0_6, %c0_7, %c0_8] : memref<4x32x32xf32, #tpu.memory_space<vmem>>, vector<1x32x32xf32>
    %14 = vector.shape_cast %13 : vector<1x32x32xf32> to vector<32x32xf32>
    %c2 = arith.constant 2 : index
    %c0_9 = arith.constant 0 : index
    %15 = vector.load %arg4[%c2, %c0_9] : memref<8x32xf32, #tpu.memory_space<vmem>>, vector<1x32xf32>
    %cst_10 = arith.constant dense<0.000000e+00> : vector<16x32xf32>
    %16 = tpu.matmul %12, %14, %cst_10 {dimension_numbers = #tpu.dot_dimension_numbers<[1], [0], [0], [1], [0, 0, 1, 1], [], []>} : vector<16x32xf32>, vector<32x32xf32>, vector<16x32xf32> -> vector<16x32xf32>
    %cst_11 = arith.constant dense<0.000000e+00> : vector<16x32xf32>
    %17 = tpu.matmul %1, %16, %cst_11 {dimension_numbers = #tpu.dot_dimension_numbers<[1], [0], [0], [1], [0, 0, 1, 1], [], []>} : vector<16x16xf32>, vector<16x32xf32>, vector<16x32xf32> -> vector<16x32xf32>
    %18 = vector.broadcast %15 : vector<1x32xf32> to vector<16x32xf32>
    %19 = arith.addf %17, %18 : vector<16x32xf32>
    %cst_12 = arith.constant 0.000000e+00 : f32
    %20 = vector.broadcast %cst_12 : f32 to vector<16x32xf32>
    %21 = arith.maximumf %19, %20 : vector<16x32xf32>
    %c1_13 = arith.constant 1 : index
    %c0_14 = arith.constant 0 : index
    %c0_15 = arith.constant 0 : index
    %22 = vector.load %arg3[%c1_13, %c0_14, %c0_15] : memref<4x32x32xf32, #tpu.memory_space<vmem>>, vector<1x32x32xf32>
    %23 = vector.shape_cast %22 : vector<1x32x32xf32> to vector<32x32xf32>
    %c3 = arith.constant 3 : index
    %c0_16 = arith.constant 0 : index
    %24 = vector.load %arg4[%c3, %c0_16] : memref<8x32xf32, #tpu.memory_space<vmem>>, vector<1x32xf32>
    %cst_17 = arith.constant dense<0.000000e+00> : vector<16x32xf32>
    %25 = tpu.matmul %21, %23, %cst_17 {dimension_numbers = #tpu.dot_dimension_numbers<[1], [0], [0], [1], [0, 0, 1, 1], [], []>} : vector<16x32xf32>, vector<32x32xf32>, vector<16x32xf32> -> vector<16x32xf32>
    %cst_18 = arith.constant dense<0.000000e+00> : vector<16x32xf32>
    %26 = tpu.matmul %1, %25, %cst_18 {dimension_numbers = #tpu.dot_dimension_numbers<[1], [0], [0], [1], [0, 0, 1, 1], [], []>} : vector<16x16xf32>, vector<16x32xf32>, vector<16x32xf32> -> vector<16x32xf32>
    %27 = vector.broadcast %24 : vector<1x32xf32> to vector<16x32xf32>
    %28 = arith.addf %26, %27 : vector<16x32xf32>
    %cst_19 = arith.constant 0.000000e+00 : f32
    %29 = vector.broadcast %cst_19 : f32 to vector<16x32xf32>
    %30 = arith.maximumf %28, %29 : vector<16x32xf32>
    %c2_20 = arith.constant 2 : index
    %c0_21 = arith.constant 0 : index
    %c0_22 = arith.constant 0 : index
    %31 = vector.load %arg3[%c2_20, %c0_21, %c0_22] : memref<4x32x32xf32, #tpu.memory_space<vmem>>, vector<1x32x32xf32>
    %32 = vector.shape_cast %31 : vector<1x32x32xf32> to vector<32x32xf32>
    %c4 = arith.constant 4 : index
    %c0_23 = arith.constant 0 : index
    %33 = vector.load %arg4[%c4, %c0_23] : memref<8x32xf32, #tpu.memory_space<vmem>>, vector<1x32xf32>
    %cst_24 = arith.constant dense<0.000000e+00> : vector<16x32xf32>
    %34 = tpu.matmul %30, %32, %cst_24 {dimension_numbers = #tpu.dot_dimension_numbers<[1], [0], [0], [1], [0, 0, 1, 1], [], []>} : vector<16x32xf32>, vector<32x32xf32>, vector<16x32xf32> -> vector<16x32xf32>
    %cst_25 = arith.constant dense<0.000000e+00> : vector<16x32xf32>
    %35 = tpu.matmul %1, %34, %cst_25 {dimension_numbers = #tpu.dot_dimension_numbers<[1], [0], [0], [1], [0, 0, 1, 1], [], []>} : vector<16x16xf32>, vector<16x32xf32>, vector<16x32xf32> -> vector<16x32xf32>
    %36 = vector.broadcast %33 : vector<1x32xf32> to vector<16x32xf32>
    %37 = arith.addf %35, %36 : vector<16x32xf32>
    %cst_26 = arith.constant 0.000000e+00 : f32
    %38 = vector.broadcast %cst_26 : f32 to vector<16x32xf32>
    %39 = arith.maximumf %37, %38 : vector<16x32xf32>
    %c3_27 = arith.constant 3 : index
    %c0_28 = arith.constant 0 : index
    %c0_29 = arith.constant 0 : index
    %40 = vector.load %arg3[%c3_27, %c0_28, %c0_29] : memref<4x32x32xf32, #tpu.memory_space<vmem>>, vector<1x32x32xf32>
    %41 = vector.shape_cast %40 : vector<1x32x32xf32> to vector<32x32xf32>
    %c5 = arith.constant 5 : index
    %c0_30 = arith.constant 0 : index
    %42 = vector.load %arg4[%c5, %c0_30] : memref<8x32xf32, #tpu.memory_space<vmem>>, vector<1x32xf32>
    %cst_31 = arith.constant dense<0.000000e+00> : vector<16x32xf32>
    %43 = tpu.matmul %39, %41, %cst_31 {dimension_numbers = #tpu.dot_dimension_numbers<[1], [0], [0], [1], [0, 0, 1, 1], [], []>} : vector<16x32xf32>, vector<32x32xf32>, vector<16x32xf32> -> vector<16x32xf32>
    %cst_32 = arith.constant dense<0.000000e+00> : vector<16x32xf32>
    %44 = tpu.matmul %1, %43, %cst_32 {dimension_numbers = #tpu.dot_dimension_numbers<[1], [0], [0], [1], [0, 0, 1, 1], [], []>} : vector<16x16xf32>, vector<16x32xf32>, vector<16x32xf32> -> vector<16x32xf32>
    %45 = vector.broadcast %42 : vector<1x32xf32> to vector<16x32xf32>
    %46 = arith.addf %44, %45 : vector<16x32xf32>
    %cst_33 = arith.constant 0.000000e+00 : f32
    %47 = vector.broadcast %cst_33 : f32 to vector<16x32xf32>
    %48 = arith.maximumf %46, %47 : vector<16x32xf32>
    %c6 = arith.constant 6 : index
    %c0_34 = arith.constant 0 : index
    %49 = vector.load %arg4[%c6, %c0_34] : memref<8x32xf32, #tpu.memory_space<vmem>>, vector<1x32xf32>
    %50 = vector.broadcast %49 : vector<1x32xf32> to vector<16x32xf32>
    %51 = arith.mulf %48, %50 : vector<16x32xf32>
    %cst_35 = arith.constant dense<0.000000e+00> : vector<16xf32>
    %52 = vector.multi_reduction <add>, %51, %cst_35 [1] : vector<16x32xf32> to vector<16xf32>
    %53 = vector.shape_cast %52 : vector<16xf32> to vector<16x1xf32>
    %c0_36 = arith.constant 0 : index
    %c0_37 = arith.constant 0 : index
    %c0_38 = arith.constant 0 : index
    %54 = vector.load %arg2[%c0_36, %c0_37, %c0_38] : memref<1x2x16xf32, #tpu.memory_space<vmem>>, vector<1x2x16xf32>
    %55 = vector.shape_cast %54 : vector<1x2x16xf32> to vector<2x16xf32>
    %cst_39 = arith.constant dense<0.000000e+00> : vector<2x1xf32>
    %56 = tpu.matmul %55, %53, %cst_39 {dimension_numbers = #tpu.dot_dimension_numbers<[1], [0], [0], [1], [0, 0, 1, 1], [], []>} : vector<2x16xf32>, vector<16x1xf32>, vector<2x1xf32> -> vector<2x1xf32>
    %c7 = arith.constant 7 : index
    %c0_40 = arith.constant 0 : index
    %57 = vector.load %arg4[%c7, %c0_40] : memref<8x32xf32, #tpu.memory_space<vmem>>, vector<1x1xf32>
    %58 = vector.broadcast %57 : vector<1x1xf32> to vector<2x1xf32>
    %59 = arith.addf %56, %58 : vector<2x1xf32>
    %c0_41 = arith.constant 0 : index
    %c0_42 = arith.constant 0 : index
    %c0_43 = arith.constant 0 : index
    %60 = vector.load %arg5[%c0_41, %c0_42, %c0_43] : memref<1x2x1xf32, #tpu.memory_space<vmem>>, vector<1x2x1xf32>
    %61 = vector.shape_cast %60 : vector<1x2x1xf32> to vector<2x1xf32>
    %62 = vector.shape_cast %59 : vector<2x1xf32> to vector<1x2x1xf32>
    tpu.vector_store %arg5[%c0_41, %c0_42, %c0_43], %62 {strides = array<i32>} : memref<1x2x1xf32, #tpu.memory_space<vmem>>, vector<1x2x1xf32>,
    return
  }
  func.func @transform_0(%arg0: i32) -> (i32, i32, i32) {
    %c0_i32 = arith.constant 0 : i32
    %c0_i32_0 = arith.constant 0 : i32
    %c0_i32_1 = arith.constant 0 : i32
    return %arg0, %c0_i32, %c0_i32_0 : i32, i32, i32
  }
  func.func @transform_1(%arg0: i32) -> (i32, i32, i32) {
    %c0_i32 = arith.constant 0 : i32
    %c0_i32_0 = arith.constant 0 : i32
    %c0_i32_1 = arith.constant 0 : i32
    return %arg0, %c0_i32, %c0_i32_0 : i32, i32, i32
  }
  func.func @transform_2(%arg0: i32) -> (i32, i32, i32) {
    %c0_i32 = arith.constant 0 : i32
    %c0_i32_0 = arith.constant 0 : i32
    %c0_i32_1 = arith.constant 0 : i32
    %c0_i32_2 = arith.constant 0 : i32
    return %c0_i32, %c0_i32_0, %c0_i32_1 : i32, i32, i32
  }
  func.func @transform_3(%arg0: i32) -> (i32, i32) {
    %c0_i32 = arith.constant 0 : i32
    %c0_i32_0 = arith.constant 0 : i32
    %c0_i32_1 = arith.constant 0 : i32
    return %c0_i32, %c0_i32_0 : i32, i32
  }
  func.func @transform_4(%arg0: i32) -> (i32, i32, i32) {
    %c0_i32 = arith.constant 0 : i32
    %c0_i32_0 = arith.constant 0 : i32
    %c0_i32_1 = arith.constant 0 : i32
    return %arg0, %c0_i32, %c0_i32_0 : i32, i32, i32
  }
}

</mosaic_0001>

<llo_original>
// kernel: tpu_custom_call.1
$region0: #{tpu_custom_call.1}
  #allocation0 [shape = 'u32[]', space=smem, size = 0x4, offset = 0x4, fixed_abs, tag = 'smem constant byte address 0x4 - core index']
  #allocation1 [shape = 'u32[144,128]{1,0:T(1,128)}', space=vmem, size = 0x12000, scoped, tag = 'internal scratch']
  %s0 = inlined_call_operand.hbm [shape: f32[2,16,16], index: 0, kind: input, shape index: {}]
  %s1 = inlined_call_operand.hbm [shape: f32[2,2,16], index: 1, kind: input, shape index: {}]
  %s2 = inlined_call_operand.hbm [shape: f32[4,32,32], index: 2, kind: input, shape index: {}]
  %s3 = inlined_call_operand.vmem [shape: f32[8,32], index: 3, kind: input, shape index: {}]
  %s4 = inlined_call_operand.vmem [shape: f32[2,2,1], index: 4, kind: output, shape index: {}]
  %s5 = sld [smem:[#allocation0]]
  $region61: #{tpu_custom_call.1} parent=0
    _
  %s7 = ssub.s32 1, %s5
  %s8 = scalar_select 0, %s7, %s5
  $region1: #{tpu_custom_call.1} parent=0
    #allocation2 [shape = 'u8[16384]{0}', space=vmem, size = 0x4000, scoped, tag = 'input window, operand 0']
    #allocation3 [shape = 's32[2]{0}', space=sflag, size = 0x8, scoped, tag = 'scoped memory for tpu_custom_call.1']
    #allocation4 [shape = 'u8[2048]{0}', space=vmem, size = 0x800, scoped, tag = 'input window, operand 1']
    #allocation5 [shape = 's32[2]{0}', space=sflag, size = 0x8, scoped, tag = 'scoped memory for tpu_custom_call.1']
    #allocation6 [shape = 'u8[65536]{0}', space=vmem, size = 0x10000, scoped, tag = 'input window, operand 2, single buffered']
    %9 = vsyncpa [#allocation3], 0
    %s10 = scalar_lea.sflag [#allocation3], 1
    %11 = vsyncpa %s10, 0
    %12 = vsyncpa [#allocation5], 0
    %s13 = scalar_lea.sflag [#allocation5], 1
    %14 = vsyncpa %s13, 0
    loop: start=0, step=1, limit=4
    $region2: #{tpu_custom_call.1} parent=1 // loop_pre_header
      _
    $region3: #{tpu_custom_call.1} parent=1 // loop_header
      %s16 = sphi 0, %s20
      %p17 = scmp.ge.s32.totalorder %s16, 4
      %s26 = sphi 0, %s28
      %s29 = sphi 0, %s26
      %s30 = sphi 0, %s29
      %s46 = sphi 0, %s30
      %s52 = sphi 0, %s54
      %s55 = sphi 0, %s52
      %s56 = sphi 0, %s55
      %s72 = sphi 0, %s56
      %s76 = sphi 0, %s76
      %s78 = sphi 0, %s76
      %s79 = sphi 0, %s78
      %s93 = sphi 0, %s79
      %s97 = sphi 0, %s97
      %s99 = sphi 0, %s97
      %s100 = sphi 0, %s99
      %s114 = sphi 0, %s100
      %s120 = sphi 0, %s122
      %s123 = sphi 0, %s120
      %s124 = sphi 0, %s123
      %s140 = sphi 0, %s124
    $region4: #{tpu_custom_call.1} parent=1 // loop_header_branch
      %19 = sbr.rel (%p17) target = $region8
    $region5: #{tpu_custom_call.1} parent=1 // loop_body
      %s21 = ssub.s32 %s16, 1
      %s22 = ssub.s32 %s16, 2
      %s23 = sadd.s32 %s16, 1
      %s24 = ssub.s32 %s16, %s23
      %p25 = scmp.eq.s32.totalorder %s24, 0
      %s27 = sadd.s32 %s26, 1
      %s28 = scalar_select %p25, %s26, %s27
      %p31 = pneg %p25
      %p32 = scmp.eq.s32.totalorder %s16, 1
      %p33 = por %p31, %p32
      %p34 = scmp.ne.s32.totalorder %s26, %s29
      %p35 = scmp.eq.s32.totalorder %s16, 0
      %p36 = por %p34, %p35
      %p37 = scmp.ne.s32.totalorder %s26, %s29
      %p38 = scmp.eq.s32.totalorder %s21, 1
      %p39 = por %p37, %p38
      %p40 = scmp.ne.s32.totalorder %s29, %s30
      %p41 = scmp.eq.s32.totalorder %s21, 0
      %p42 = por %p40, %p41
      %p43 = scmp.ne.s32.totalorder %s29, %s30
      %p44 = scmp.eq.s32.totalorder %s22, 1
      %p45 = por %p43, %p44
      %p47 = scmp.ne.s32.totalorder %s30, %s46
      %p48 = scmp.eq.s32.totalorder %s22, 0
      %p49 = por %p47, %p48
      %s50 = ssub.s32 %s16, %s23
      %p51 = scmp.eq.s32.totalorder %s50, 0
      %s53 = sadd.s32 %s52, 1
      %s54 = scalar_select %p51, %s52, %s53
      %p57 = pneg %p51
      %p58 = scmp.eq.s32.totalorder %s16, 1
      %p59 = por %p57, %p58
      %p60 = scmp.ne.s32.totalorder %s52, %s55
      %p61 = scmp.eq.s32.totalorder %s16, 0
      %p62 = por %p60, %p61
      %p63 = scmp.ne.s32.totalorder %s52, %s55
      %p64 = scmp.eq.s32.totalorder %s21, 1
      %p65 = por %p63, %p64
      %p66 = scmp.ne.s32.totalorder %s55, %s56
      %p67 = scmp.eq.s32.totalorder %s21, 0
      %p68 = por %p66, %p67
      %p69 = scmp.ne.s32.totalorder %s55, %s56
      %p70 = scmp.eq.s32.totalorder %s22, 1
      %p71 = por %p69, %p70
      %p73 = scmp.ne.s32.totalorder %s56, %s72
      %p74 = scmp.eq.s32.totalorder %s22, 0
      %p75 = por %p73, %p74
      %s77 = sadd.s32 %s76, 1
      %p80 = scmp.eq.s32.totalorder %s16, 1
      %p81 = scmp.ne.s32.totalorder %s76, %s78
      %p82 = scmp.eq.s32.totalorder %s16, 0
      %p83 = por %p81, %p82
      %p84 = scmp.ne.s32.totalorder %s76, %s78
      %p85 = scmp.eq.s32.totalorder %s21, 1
      %p86 = por %p84, %p85
      %p87 = scmp.ne.s32.totalorder %s78, %s79
      %p88 = scmp.eq.s32.totalorder %s21, 0
      %p89 = por %p87, %p88
      %p90 = scmp.ne.s32.totalorder %s78, %s79
      %p91 = scmp.eq.s32.totalorder %s22, 1
      %p92 = por %p90, %p91
      %p94 = scmp.ne.s32.totalorder %s79, %s93
      %p95 = scmp.eq.s32.totalorder %s22, 0
      %p96 = por %p94, %p95
      %s98 = sadd.s32 %s97, 1
      %p101 = scmp.eq.s32.totalorder %s16, 1
      %p102 = scmp.ne.s32.totalorder %s97, %s99
      %p103 = scmp.eq.s32.totalorder %s16, 0
      %p104 = por %p102, %p103
      %p105 = scmp.ne.s32.totalorder %s97, %s99
      %p106 = scmp.eq.s32.totalorder %s21, 1
      %p107 = por %p105, %p106
      %p108 = scmp.ne.s32.totalorder %s99, %s100
      %p109 = scmp.eq.s32.totalorder %s21, 0
      %p110 = por %p108, %p109
      %p111 = scmp.ne.s32.totalorder %s99, %s100
      %p112 = scmp.eq.s32.totalorder %s22, 1
      %p113 = por %p111, %p112
      %p115 = scmp.ne.s32.totalorder %s100, %s114
      %p116 = scmp.eq.s32.totalorder %s22, 0
      %p117 = por %p115, %p116
      %s118 = ssub.s32 %s16, %s23
      %p119 = scmp.eq.s32.totalorder %s118, 0
      %s121 = sadd.s32 %s120, 1
      %s122 = scalar_select %p119, %s120, %s121
      %p125 = pneg %p119
      %p126 = scmp.eq.s32.totalorder %s16, 1
      %p127 = por %p125, %p126
      %p128 = scmp.ne.s32.totalorder %s120, %s123
      %p129 = scmp.eq.s32.totalorder %s16, 0
      %p130 = por %p128, %p129
      %p131 = scmp.ne.s32.totalorder %s120, %s123
      %p132 = scmp.eq.s32.totalorder %s21, 1
      %p133 = por %p131, %p132
      %p134 = scmp.ne.s32.totalorder %s123, %s124
      %p135 = scmp.eq.s32.totalorder %s21, 0
      %p136 = por %p134, %p135
      %p137 = scmp.ne.s32.totalorder %s123, %s124
      %p138 = scmp.eq.s32.totalorder %s22, 1
      %p139 = por %p137, %p138
      %p141 = scmp.ne.s32.totalorder %s124, %s140
      %p142 = scmp.eq.s32.totalorder %s22, 0
      %p143 = por %p141, %p142
      %p144 = scmp.le.s32.totalorder 1, %s16
      %p145 = scmp.lt.s32.totalorder %s16, 3
      %p146 = pnand %p144, %p145
      %p147 = pneg %p146
      // Predicated region
      $region9: #{tpu_custom_call.1} parent=5 // pred_check
        _
      $region10: #{tpu_custom_call.1} parent=5 // pred_check_branch
        %149 = sbr.rel (%p146) target = $region12
      $region11: #{tpu_custom_call.1} parent=5 // pred_region
        %s150 = ssub.s32 %s16, 1
        // Predicated region
        $region13: #{tpu_custom_call.1} parent=11 // pred_check
          %p151 = pneg %p89
        $region14: #{tpu_custom_call.1} parent=11 // pred_check_branch
          %153 = sbr.rel (%p151) target = $region16
        $region15: #{tpu_custom_call.1} parent=11 // pred_region
          %s155 = ssub.s32 2048, 2048
          %156 = vsyncadd [#allocation5], %s155
          %s157 = sshll.u32 [#allocation6], 4
          %s158 = int_to_ptr.vmem [resolvable:$true] %s157
          %163 = dma.hbm_to_vmem [thread:$0]  %s2, 2048, %s158, [#allocation5], 128, 128, 8
        $region16: #{tpu_custom_call.1} parent=11 // pred_fallthru
          _
        // Predicated region
        $region17: #{tpu_custom_call.1} parent=11 // pred_check
          %p164 = pneg %p110
        $region18: #{tpu_custom_call.1} parent=11 // pred_check_branch
          %166 = sbr.rel (%p164) target = $region20
        $region19: #{tpu_custom_call.1} parent=11 // pred_region
          _
        $region20: #{tpu_custom_call.1} parent=11 // pred_fallthru
          _
      $region12: #{tpu_custom_call.1} parent=5 // pred_fallthru
        _
      %p167 = scmp.lt.s32.totalorder %s16, 2
      // Predicated region
      $region21: #{tpu_custom_call.1} parent=5 // pred_check
        %p168 = pneg %p167
      $region22: #{tpu_custom_call.1} parent=5 // pred_check_branch
        %170 = sbr.rel (%p168) target = $region24
      $region23: #{tpu_custom_call.1} parent=5 // pred_region
        // Predicated region
        $region25: #{tpu_custom_call.1} parent=23 // pred_check
          %p171 = pneg %p36
        $region26: #{tpu_custom_call.1} parent=23 // pred_check_branch
          %173 = sbr.rel (%p171) target = $region28
        $region27: #{tpu_custom_call.1} parent=23 // pred_region
          %s174 = sand.u32 %s26, 1
          %s175 = scalar_lea.sflag [#allocation3], %s174
          %s176 = sand.u32 %s26, 1
          %s177 = smul.addr %s176, 16
          %s178 = scalar_lea.vmem [#allocation2], %s177
          %s180 = ssub.s32 256, 256
          %181 = vsyncadd %s175, %s180
          %s182 = smul.addr %s16, 2
          %s183 = smul.addr %s182, 128
          %s184 = scalar_lea.hbm %s0, %s183
          %s185 = sshll.u32 %s178, 4
          %s186 = int_to_ptr.vmem [resolvable:$true] %s185
          %191 = dma.hbm_to_vmem [thread:$0]  %s184, 256, %s186, %s175, 128, 128, 8
        $region28: #{tpu_custom_call.1} parent=23 // pred_fallthru
          _
        // Predicated region
        $region29: #{tpu_custom_call.1} parent=23 // pred_check
          %p192 = pneg %p62
        $region30: #{tpu_custom_call.1} parent=23 // pred_check_branch
          %194 = sbr.rel (%p192) target = $region32
        $region31: #{tpu_custom_call.1} parent=23 // pred_region
          %s195 = sand.u32 %s16, 1
          %s196 = scalar_lea.sflag [#allocation5], %s195
          %s197 = sand.u32 %s52, 1
          %s198 = smul.addr %s197, 2
          %s199 = scalar_lea.vmem [#allocation4], %s198
          %s201 = ssub.s32 32, 32
          %202 = vsyncadd %s196, %s201
          %s203 = smul.addr %s16, 32
          %s204 = scalar_lea.hbm %s1, %s203
          %s206 = sshll.u32 %s199, 4
          %s207 = int_to_ptr.vmem [resolvable:$true] %s206
          %209 = dma.hbm_to_vmem [thread:$0]  %s204, 32, %s207, %s196
        $region32: #{tpu_custom_call.1} parent=23 // pred_fallthru
          _
      $region24: #{tpu_custom_call.1} parent=5 // pred_fallthru
        _
      %p210 = scmp.le.s32.totalorder 1, %s16
      %p211 = scmp.lt.s32.totalorder %s16, 3
      %p212 = pnand %p210, %p211
      %p213 = pneg %p212
      // Predicated region
      $region33: #{tpu_custom_call.1} parent=5 // pred_check
        _
      $region34: #{tpu_custom_call.1} parent=5 // pred_check_branch
        %215 = sbr.rel (%p212) target = $region36
      $region35: #{tpu_custom_call.1} parent=5 // pred_region
        %s216 = ssub.s32 %s16, 1
        %s217 = sand.u32 %s29, 1
        %s218 = scalar_lea.sflag [#allocation3], %s217
        %s219 = sand.u32 %s29, 1
        %s220 = smul.addr %s219, 16
        %s221 = scalar_lea.vmem [#allocation2], %s220
        // Predicated region
        $region37: #{tpu_custom_call.1} parent=35 // pred_check
          %p222 = pneg %p42
        $region38: #{tpu_custom_call.1} parent=35 // pred_check_branch
          %224 = sbr.rel (%p222) target = $region40
        $region39: #{tpu_custom_call.1} parent=35 // pred_region
          %225 = dma.done %s218, 256
        $region40: #{tpu_custom_call.1} parent=35 // pred_fallthru
          _
        %s226 = sand.u32 %s21, 1
        %s227 = scalar_lea.sflag [#allocation5], %s226
        %s228 = sand.u32 %s55, 1
        %s229 = smul.addr %s228, 2
        %s230 = scalar_lea.vmem [#allocation4], %s229
        // Predicated region
        $region41: #{tpu_custom_call.1} parent=35 // pred_check
          %p231 = pneg %p68
        $region42: #{tpu_custom_call.1} parent=35 // pred_check_branch
          %233 = sbr.rel (%p231) target = $region44
        $region43: #{tpu_custom_call.1} parent=35 // pred_region
          %234 = dma.done %s227, 32
        $region44: #{tpu_custom_call.1} parent=35 // pred_fallthru
          _
        // Predicated region
        $region45: #{tpu_custom_call.1} parent=35 // pred_check
          %p235 = pneg %p89
        $region46: #{tpu_custom_call.1} parent=35 // pred_check_branch
          %237 = sbr.rel (%p235) target = $region48
        $region47: #{tpu_custom_call.1} parent=35 // pred_region
          %238 = dma.done [#allocation5], 2048
        $region48: #{tpu_custom_call.1} parent=35 // pred_fallthru
          _
        %s239 = sand.u32 %s29, 1
        %s240 = scalar_lea.sflag [#allocation3], %s239
        %s241 = sand.u32 %s29, 1
        %s242 = smul.addr %s241, 16
        %s243 = scalar_lea.vmem [#allocation2], %s242
        %p244 = pneg %p42
        %p245 = pneg %p39
        %s246 = sand.u32 %s21, 1
        %s247 = scalar_lea.sflag [#allocation5], %s246
        %s248 = sand.u32 %s55, 1
        %s249 = smul.addr %s248, 2
        %s250 = scalar_lea.vmem [#allocation4], %s249
        %p251 = pneg %p68
        %p252 = pneg %p65
        %p253 = pneg %p89
        %p254 = pneg %p86
        %p255 = pneg %p110
        %p256 = pneg %p107
        %p257 = pneg %p136
        %p258 = pneg %p133
        %p259 = scmp.lt.s32.totalorder %s21, 1
        %s260 = scalar_select %p259, %s21, 1
        %s261 = smul.addr %s260, 2
        %s262 = scalar_lea.vmem %s4, %s261
        %p263 = scmp.lt.s32.totalorder %s21, 1
        %s264 = scalar_select %p263, %s21, 1
        %s265 = smul.addr %s264, 2
        %s266 = scalar_lea.vmem %s4, %s265
        %v267 = vld [vmem:[%s221] sm:$0xff]
        %v268 = vld [vmem:[%s221 + $0x8] sm:$0xff]
        %vm269 = vcmask 130048
        %v270 = vsel %vm269, %v267, 0.0
        %271 = vadd.xlane.f32.xlu0 %v270
        %v272 = vpop.xlane.xlu0 %271
        %v273 = vsel %vm269, %v268, 0.0
        %274 = vadd.xlane.f32.xlu0 %v273
        %v275 = vpop.xlane.xlu0 %274
        %v276 = vld [vmem:[%s3] sm:$0x1]
        %v277 = vld [vmem:[%s3 + $0x1] sm:$0x1]
        %v278 = vlaneseq
        %v279 = vshrl.u32 %v278, 7
        %v280 = vsub.s32 0, %v279
        %v281 = vrot.slane %v276, %v280
        %v282 = vmul.f32 %v272, %v281
        %v283 = vmul.f32 %v275, %v281
        %v284 = vlaneseq
        %v285 = vshrl.u32 %v284, 7
        %v286 = vsub.s32 0, %v285
        %v287 = vrot.slane %v277, %v286
        %v288 = vadd.f32 %v282, %v287
        %v289 = vadd.f32 %v283, %v287
        %v290 = vmax.f32 %v288, 0.0
        %v291 = vmax.f32 %v289, 0.0
        %v292 = vld [vmem:[#allocation6] sm:$0xff]
        %v293 = vld [vmem:[#allocation6 + $0x8] sm:$0xff]
        %v294 = vld [vmem:[#allocation6 + $0x10] sm:$0xff]
        %v295 = vld [vmem:[#allocation6 + $0x18] sm:$0xff]
        %v296 = vld [vmem:[%s3 + $0x2] sm:$0x1]
        %vm297 = vcmask 261120
        %v299 = vsel %vm297, %v290, 0
        %v302 = vsel %vm297, %v291, 0
        %304 = vmatprep.subr.mxu0 0.0
        %305 = vmatpush1.msra.mxu0 %v292
        %306 = vmatprep.subr.mxu0 0.0
        %307 = vmatpush1.msra.mxu0 %v293
        %308 = vmatprep.subr.mxu0 0.0
        %309 = vmatpush1.msra.mxu0 %v294
        %310 = vmatprep.subr.mxu0 0.0
        %311 = vmatpush1.msra.mxu0 %v295
        %312 = vmatprep.subr.mxu0 0.0
        %313 = vmatpush1.msra.mxu0 0.0
        %314 = vmatprep.subr.mxu0 0.0
        %315 = vmatpush1.msra.mxu0 0.0
        %316 = vmatprep.subr.mxu0 0.0
        %317 = vmatpush1.msra.mxu0 0.0
        %318 = vmatprep.subr.mxu0 0.0
        %319 = vmatpush1.msra.mxu0 0.0
        %320 = vmatprep.subr.mxu0 0.0
        %321 = vmatpush1.msra.mxu0 0.0
        %322 = vmatprep.subr.mxu0 0.0
        %323 = vmatpush1.msra.mxu0 0.0
        %324 = vmatprep.subr.mxu0 0.0
        %325 = vmatpush1.msra.mxu0 0.0
        %326 = vmatprep.subr.mxu0 0.0
        %327 = vmatpush1.msra.mxu0 0.0
        %328 = vmatprep.subr.mxu0 0.0
        %329 = vmatpush1.msra.mxu0 0.0
        %330 = vmatprep.subr.mxu0 0.0
        %331 = vmatpush1.msra.mxu0 0.0
        %332 = vmatprep.subr.mxu0 0.0
        %333 = vmatpush1.msra.mxu0 0.0
        %334 = vmatprep.subr.mxu0 0.0
        %335 = vmatpush1.msra.mxu0 0.0
        %336 = vmatprep.subr.mxu0 0.0
        %337 = vmatpush1.msra.mxu0 0.0
        %338 = vmatprep.subr.mxu0 0.0
        %339 = vmatpush1.msra.mxu0 0.0
        %340 = vmatprep.subr.mxu0 0.0
        %341 = vmatpush1.msra.mxu0 0.0
        %342 = vmatprep.subr.mxu0 0.0
        %343 = vmatpush1.msra.mxu0 0.0
        %344 = vmatprep.subr.mxu0 0.0
        %345 = vmatpush1.msra.mxu0 0.0
        %346 = vmatprep.subr.mxu0 0.0
        %347 = vmatpush1.msra.mxu0 0.0
        %348 = vmatprep.subr.mxu0 0.0
        %349 = vmatpush1.msra.mxu0 0.0
        %350 = vmatprep.subr.mxu0 0.0
        %351 = vmatpush1.msra.mxu0 0.0
        %352 = vmatprep.subr.mxu0 0.0
        %353 = vmatpush1.msra.mxu0 0.0
        %354 = vmatprep.subr.mxu0 0.0
        %355 = vmatpush1.msra.mxu0 0.0
        %356 = vmatprep.subr.mxu0 0.0
        %357 = vmatpush1.msra.mxu0 0.0
        %358 = vmatprep.subr.mxu0 0.0
        %359 = vmatpush1.msra.mxu0 0.0
        %360 = vmatprep.subr.mxu0 0.0
        %361 = vmatpush1.msra.mxu0 0.0
        %362 = vmatprep.subr.mxu0 0.0
        %363 = vmatpush1.msra.mxu0 0.0
        %364 = vmatprep.subr.mxu0 0.0
        %365 = vmatpush1.msra.mxu0 0.0
        %366 = vmatprep.subr.mxu0 0.0
        %367 = vmatpush1.msra.mxu0 0.0
        %368 = vmatprep.mubr.f32.mxu0 0.0
        %369 = vmatmul.mubr.f32.gmra.mrb[0].mxu0 %v299
        %v370 = vpop.f32.mrb[0].mxu0
        %v371 = vadd.f32 0.0, %v370
        %v372 = vpop.f32.mrb[0].mxu0
        %373 = vmatprep.mubr.f32.mxu0 0.0
        %374 = vmatmul.mubr.f32.gmra.mrb[0].mxu0 %v302
        %v375 = vpop.f32.mrb[0].mxu0
        %v376 = vadd.f32 0.0, %v375
        %v377 = vpop.f32.mrb[0].mxu0
        %378 = vdwg.mxu0
        %v379 = vlaneseq
        %v380 = vshrl.u32 %v379, 7
        %v381 = vsub.s32 0, %v380
        %v382 = vrot.slane %v296, %v381
        %v384 = vsel %vm269, %v267, 0
        %v387 = vsel %vm269, %v268, 0
        %389 = vmatprep.subr.mxu0 0.0
        %390 = vmatpush1.msra.mxu0 %v371
        %391 = vmatprep.subr.mxu0 0.0
        %392 = vmatpush1.msra.mxu0 %v376
        %393 = vmatprep.subr.mxu0 0.0
        %394 = vmatpush1.msra.mxu0 0.0
        %395 = vmatprep.subr.mxu0 0.0
        %396 = vmatpush1.msra.mxu0 0.0
        %397 = vmatprep.subr.mxu0 0.0
        %398 = vmatpush1.msra.mxu0 0.0
        %399 = vmatprep.subr.mxu0 0.0
        %400 = vmatpush1.msra.mxu0 0.0
        %401 = vmatprep.subr.mxu0 0.0
        %402 = vmatpush1.msra.mxu0 0.0
        %403 = vmatprep.subr.mxu0 0.0
        %404 = vmatpush1.msra.mxu0 0.0
        %405 = vmatprep.subr.mxu0 0.0
        %406 = vmatpush1.msra.mxu0 0.0
        %407 = vmatprep.subr.mxu0 0.0
        %408 = vmatpush1.msra.mxu0 0.0
        %409 = vmatprep.subr.mxu0 0.0
        %410 = vmatpush1.msra.mxu0 0.0
        %411 = vmatprep.subr.mxu0 0.0
        %412 = vmatpush1.msra.mxu0 0.0
        %413 = vmatprep.subr.mxu0 0.0
        %414 = vmatpush1.msra.mxu0 0.0
        %415 = vmatprep.subr.mxu0 0.0
        %416 = vmatpush1.msra.mxu0 0.0
        %417 = vmatprep.subr.mxu0 0.0
        %418 = vmatpush1.msra.mxu0 0.0
        %419 = vmatprep.subr.mxu0 0.0
        %420 = vmatpush1.msra.mxu0 0.0
        %421 = vmatprep.subr.mxu0 0.0
        %422 = vmatpush1.msra.mxu0 0.0
        %423 = vmatprep.subr.mxu0 0.0
        %424 = vmatpush1.msra.mxu0 0.0
        %425 = vmatprep.subr.mxu0 0.0
        %426 = vmatpush1.msra.mxu0 0.0
        %427 = vmatprep.subr.mxu0 0.0
        %428 = vmatpush1.msra.mxu0 0.0
        %429 = vmatprep.subr.mxu0 0.0
        %430 = vmatpush1.msra.mxu0 0.0
        %431 = vmatprep.subr.mxu0 0.0
        %432 = vmatpush1.msra.mxu0 0.0
        %433 = vmatprep.subr.mxu0 0.0
        %434 = vmatpush1.msra.mxu0 0.0
        %435 = vmatprep.subr.mxu0 0.0
        %436 = vmatpush1.msra.mxu0 0.0
        %437 = vmatprep.subr.mxu0 0.0
        %438 = vmatpush1.msra.mxu0 0.0
        %439 = vmatprep.subr.mxu0 0.0
        %440 = vmatpush1.msra.mxu0 0.0
        %441 = vmatprep.subr.mxu0 0.0
        %442 = vmatpush1.msra.mxu0 0.0
        %443 = vmatprep.subr.mxu0 0.0
        %444 = vmatpush1.msra.mxu0 0.0
        %445 = vmatprep.subr.mxu0 0.0
        %446 = vmatpush1.msra.mxu0 0.0
        %447 = vmatprep.subr.mxu0 0.0
        %448 = vmatpush1.msra.mxu0 0.0
        %449 = vmatprep.subr.mxu0 0.0
        %450 = vmatpush1.msra.mxu0 0.0
        %451 = vmatprep.subr.mxu0 0.0
        %452 = vmatpush1.msra.mxu0 0.0
        %453 = vmatprep.mubr.f32.mxu0 0.0
        %454 = vmatmul.mubr.f32.gmra.mrb[0].mxu0 %v384
        %v455 = vpop.f32.mrb[0].mxu0
        %v456 = vadd.f32 %v382, %v455
        %v457 = vpop.f32.mrb[0].mxu0
        %458 = vmatprep.mubr.f32.mxu0 0.0
        %459 = vmatmul.mubr.f32.gmra.mrb[0].mxu0 %v387
        %v460 = vpop.f32.mrb[0].mxu0
        %v461 = vadd.f32 %v382, %v460
        %v462 = vpop.f32.mrb[0].mxu0
        %463 = vdwg.mxu0
        %v464 = vmax.f32 %v456, 0.0
        %v465 = vmax.f32 %v461, 0.0
        %s466 = scalar_lea.vmem [#allocation6], 32
        %v467 = vld [vmem:[%s466] sm:$0xff]
        %v468 = vld [vmem:[%s466 + $0x8] sm:$0xff]
        %v469 = vld [vmem:[%s466 + $0x10] sm:$0xff]
        %v470 = vld [vmem:[%s466 + $0x18] sm:$0xff]
        %v471 = vld [vmem:[%s3 + $0x3] sm:$0x1]
        %v473 = vsel %vm297, %v464, 0
        %v476 = vsel %vm297, %v465, 0
        %478 = vmatprep.subr.mxu0 0.0
        %479 = vmatpush1.msra.mxu0 %v467
        %480 = vmatprep.subr.mxu0 0.0
        %481 = vmatpush1.msra.mxu0 %v468
        %482 = vmatprep.subr.mxu0 0.0
        %483 = vmatpush1.msra.mxu0 %v469
        %484 = vmatprep.subr.mxu0 0.0
        %485 = vmatpush1.msra.mxu0 %v470
        %486 = vmatprep.subr.mxu0 0.0
        %487 = vmatpush1.msra.mxu0 0.0
        %488 = vmatprep.subr.mxu0 0.0
        %489 = vmatpush1.msra.mxu0 0.0
        %490 = vmatprep.subr.mxu0 0.0
        %491 = vmatpush1.msra.mxu0 0.0
        %492 = vmatprep.subr.mxu0 0.0
        %493 = vmatpush1.msra.mxu0 0.0
        %494 = vmatprep.subr.mxu0 0.0
        %495 = vmatpush1.msra.mxu0 0.0
        %496 = vmatprep.subr.mxu0 0.0
        %497 = vmatpush1.msra.mxu0 0.0
        %498 = vmatprep.subr.mxu0 0.0
        %499 = vmatpush1.msra.mxu0 0.0
        %500 = vmatprep.subr.mxu0 0.0
        %501 = vmatpush1.msra.mxu0 0.0
        %502 = vmatprep.subr.mxu0 0.0
        %503 = vmatpush1.msra.mxu0 0.0
        %504 = vmatprep.subr.mxu0 0.0
        %505 = vmatpush1.msra.mxu0 0.0
        %506 = vmatprep.subr.mxu0 0.0
        %507 = vmatpush1.msra.mxu0 0.0
        %508 = vmatprep.subr.mxu0 0.0
        %509 = vmatpush1.msra.mxu0 0.0
        %510 = vmatprep.subr.mxu0 0.0
        %511 = vmatpush1.msra.mxu0 0.0
        %512 = vmatprep.subr.mxu0 0.0
        %513 = vmatpush1.msra.mxu0 0.0
        %514 = vmatprep.subr.mxu0 0.0
        %515 = vmatpush1.msra.mxu0 0.0
        %516 = vmatprep.subr.mxu0 0.0
        %517 = vmatpush1.msra.mxu0 0.0
        %518 = vmatprep.subr.mxu0 0.0
        %519 = vmatpush1.msra.mxu0 0.0
        %520 = vmatprep.subr.mxu0 0.0
        %521 = vmatpush1.msra.mxu0 0.0
        %522 = vmatprep.subr.mxu0 0.0
        %523 = vmatpush1.msra.mxu0 0.0
        %524 = vmatprep.subr.mxu0 0.0
        %525 = vmatpush1.msra.mxu0 0.0
        %526 = vmatprep.subr.mxu0 0.0
        %527 = vmatpush1.msra.mxu0 0.0
        %528 = vmatprep.subr.mxu0 0.0
        %529 = vmatpush1.msra.mxu0 0.0
        %530 = vmatprep.subr.mxu0 0.0
        %531 = vmatpush1.msra.mxu0 0.0
        %532 = vmatprep.subr.mxu0 0.0
        %533 = vmatpush1.msra.mxu0 0.0
        %534 = vmatprep.subr.mxu0 0.0
        %535 = vmatpush1.msra.mxu0 0.0
        %536 = vmatprep.subr.mxu0 0.0
        %537 = vmatpush1.msra.mxu0 0.0
        %538 = vmatprep.subr.mxu0 0.0
        %539 = vmatpush1.msra.mxu0 0.0
        %540 = vmatprep.subr.mxu0 0.0
        %541 = vmatpush1.msra.mxu0 0.0
        %542 = vmatprep.mubr.f32.mxu0 0.0
        %543 = vmatmul.mubr.f32.gmra.mrb[0].mxu0 %v473
        %v544 = vpop.f32.mrb[0].mxu0
        %v545 = vadd.f32 0.0, %v544
        %v546 = vpop.f32.mrb[0].mxu0
        %547 = vmatprep.mubr.f32.mxu0 0.0
        %548 = vmatmul.mubr.f32.gmra.mrb[0].mxu0 %v476
        %v549 = vpop.f32.mrb[0].mxu0
        %v550 = vadd.f32 0.0, %v549
        %v551 = vpop.f32.mrb[0].mxu0
        %552 = vdwg.mxu0
        %v553 = vlaneseq
        %v554 = vshrl.u32 %v553, 7
        %v555 = vsub.s32 0, %v554
        %v556 = vrot.slane %v471, %v555
        %557 = vmatprep.subr.mxu0 0.0
        %558 = vmatpush1.msra.mxu0 %v545
        %559 = vmatprep.subr.mxu0 0.0
        %560 = vmatpush1.msra.mxu0 %v550
        %561 = vmatprep.subr.mxu0 0.0
        %562 = vmatpush1.msra.mxu0 0.0
        %563 = vmatprep.subr.mxu0 0.0
        %564 = vmatpush1.msra.mxu0 0.0
        %565 = vmatprep.subr.mxu0 0.0
        %566 = vmatpush1.msra.mxu0 0.0
        %567 = vmatprep.subr.mxu0 0.0
        %568 = vmatpush1.msra.mxu0 0.0
        %569 = vmatprep.subr.mxu0 0.0
        %570 = vmatpush1.msra.mxu0 0.0
        %571 = vmatprep.subr.mxu0 0.0
        %572 = vmatpush1.msra.mxu0 0.0
        %573 = vmatprep.subr.mxu0 0.0
        %574 = vmatpush1.msra.mxu0 0.0
        %575 = vmatprep.subr.mxu0 0.0
        %576 = vmatpush1.msra.mxu0 0.0
        %577 = vmatprep.subr.mxu0 0.0
        %578 = vmatpush1.msra.mxu0 0.0
        %579 = vmatprep.subr.mxu0 0.0
        %580 = vmatpush1.msra.mxu0 0.0
        %581 = vmatprep.subr.mxu0 0.0
        %582 = vmatpush1.msra.mxu0 0.0
        %583 = vmatprep.subr.mxu0 0.0
        %584 = vmatpush1.msra.mxu0 0.0
        %585 = vmatprep.subr.mxu0 0.0
        %586 = vmatpush1.msra.mxu0 0.0
        %587 = vmatprep.subr.mxu0 0.0
        %588 = vmatpush1.msra.mxu0 0.0
        %589 = vmatprep.subr.mxu0 0.0
        %590 = vmatpush1.msra.mxu0 0.0
        %591 = vmatprep.subr.mxu0 0.0
        %592 = vmatpush1.msra.mxu0 0.0
        %593 = vmatprep.subr.mxu0 0.0
        %594 = vmatpush1.msra.mxu0 0.0
        %595 = vmatprep.subr.mxu0 0.0
        %596 = vmatpush1.msra.mxu0 0.0
        %597 = vmatprep.subr.mxu0 0.0
        %598 = vmatpush1.msra.mxu0 0.0
        %599 = vmatprep.subr.mxu0 0.0
        %600 = vmatpush1.msra.mxu0 0.0
        %601 = vmatprep.subr.mxu0 0.0
        %602 = vmatpush1.msra.mxu0 0.0
        %603 = vmatprep.subr.mxu0 0.0
        %604 = vmatpush1.msra.mxu0 0.0
        %605 = vmatprep.subr.mxu0 0.0
        %606 = vmatpush1.msra.mxu0 0.0
        %607 = vmatprep.subr.mxu0 0.0
        %608 = vmatpush1.msra.mxu0 0.0
        %609 = vmatprep.subr.mxu0 0.0
        %610 = vmatpush1.msra.mxu0 0.0
        %611 = vmatprep.subr.mxu0 0.0
        %612 = vmatpush1.msra.mxu0 0.0
        %613 = vmatprep.subr.mxu0 0.0
        %614 = vmatpush1.msra.mxu0 0.0
        %615 = vmatprep.subr.mxu0 0.0
        %616 = vmatpush1.msra.mxu0 0.0
        %617 = vmatprep.subr.mxu0 0.0
        %618 = vmatpush1.msra.mxu0 0.0
        %619 = vmatprep.subr.mxu0 0.0
        %620 = vmatpush1.msra.mxu0 0.0
        %621 = vmatprep.mubr.f32.mxu0 0.0
        %622 = vmatmul.mubr.f32.gmra.mrb[0].mxu0 %v384
        %v623 = vpop.f32.mrb[0].mxu0
        %v624 = vadd.f32 %v556, %v623
        %v625 = vpop.f32.mrb[0].mxu0
        %626 = vmatprep.mubr.f32.mxu0 0.0
        %627 = vmatmul.mubr.f32.gmra.mrb[0].mxu0 %v387
        %v628 = vpop.f32.mrb[0].mxu0
        %v629 = vadd.f32 %v556, %v628
        %v630 = vpop.f32.mrb[0].mxu0
        %631 = vdwg.mxu0
        %v632 = vmax.f32 %v624, 0.0
        %v633 = vmax.f32 %v629, 0.0
        %s634 = scalar_lea.vmem [#allocation6], 64
        %v635 = vld [vmem:[%s634] sm:$0xff]
        %v636 = vld [vmem:[%s634 + $0x8] sm:$0xff]
        %v637 = vld [vmem:[%s634 + $0x10] sm:$0xff]
        %v638 = vld [vmem:[%s634 + $0x18] sm:$0xff]
        %v639 = vld [vmem:[%s3 + $0x4] sm:$0x1]
        %v641 = vsel %vm297, %v632, 0
        %v644 = vsel %vm297, %v633, 0
        %646 = vmatprep.subr.mxu0 0.0
        %647 = vmatpush1.msra.mxu0 %v635
        %648 = vmatprep.subr.mxu0 0.0
        %649 = vmatpush1.msra.mxu0 %v636
        %650 = vmatprep.subr.mxu0 0.0
        %651 = vmatpush1.msra.mxu0 %v637
        %652 = vmatprep.subr.mxu0 0.0
        %653 = vmatpush1.msra.mxu0 %v638
        %654 = vmatprep.subr.mxu0 0.0
        %655 = vmatpush1.msra.mxu0 0.0
        %656 = vmatprep.subr.mxu0 0.0
        %657 = vmatpush1.msra.mxu0 0.0
        %658 = vmatprep.subr.mxu0 0.0
        %659 = vmatpush1.msra.mxu0 0.0
        %660 = vmatprep.subr.mxu0 0.0
        %661 = vmatpush1.msra.mxu0 0.0
        %662 = vmatprep.subr.mxu0 0.0
        %663 = vmatpush1.msra.mxu0 0.0
        %664 = vmatprep.subr.mxu0 0.0
        %665 = vmatpush1.msra.mxu0 0.0
        %666 = vmatprep.subr.mxu0 0.0
        %667 = vmatpush1.msra.mxu0 0.0
        %668 = vmatprep.subr.mxu0 0.0
        %669 = vmatpush1.msra.mxu0 0.0
        %670 = vmatprep.subr.mxu0 0.0
        %671 = vmatpush1.msra.mxu0 0.0
        %672 = vmatprep.subr.mxu0 0.0
        %673 = vmatpush1.msra.mxu0 0.0
        %674 = vmatprep.subr.mxu0 0.0
        %675 = vmatpush1.msra.mxu0 0.0
        %676 = vmatprep.subr.mxu0 0.0
        %677 = vmatpush1.msra.mxu0 0.0
        %678 = vmatprep.subr.mxu0 0.0
        %679 = vmatpush1.msra.mxu0 0.0
        %680 = vmatprep.subr.mxu0 0.0
        %681 = vmatpush1.msra.mxu0 0.0
        %682 = vmatprep.subr.mxu0 0.0
        %683 = vmatpush1.msra.mxu0 0.0
        %684 = vmatprep.subr.mxu0 0.0
        %685 = vmatpush1.msra.mxu0 0.0
        %686 = vmatprep.subr.mxu0 0.0
        %687 = vmatpush1.msra.mxu0 0.0
        %688 = vmatprep.subr.mxu0 0.0
        %689 = vmatpush1.msra.mxu0 0.0
        %690 = vmatprep.subr.mxu0 0.0
        %691 = vmatpush1.msra.mxu0 0.0
        %692 = vmatprep.subr.mxu0 0.0
        %693 = vmatpush1.msra.mxu0 0.0
        %694 = vmatprep.subr.mxu0 0.0
        %695 = vmatpush1.msra.mxu0 0.0
        %696 = vmatprep.subr.mxu0 0.0
        %697 = vmatpush1.msra.mxu0 0.0
        %698 = vmatprep.subr.mxu0 0.0
        %699 = vmatpush1.msra.mxu0 0.0
        %700 = vmatprep.subr.mxu0 0.0
        %701 = vmatpush1.msra.mxu0 0.0
        %702 = vmatprep.subr.mxu0 0.0
        %703 = vmatpush1.msra.mxu0 0.0
        %704 = vmatprep.subr.mxu0 0.0
        %705 = vmatpush1.msra.mxu0 0.0
        %706 = vmatprep.subr.mxu0 0.0
        %707 = vmatpush1.msra.mxu0 0.0
        %708 = vmatprep.subr.mxu0 0.0
        %709 = vmatpush1.msra.mxu0 0.0
        %710 = vmatprep.mubr.f32.mxu0 0.0
        %711 = vmatmul.mubr.f32.gmra.mrb[0].mxu0 %v641
        %v712 = vpop.f32.mrb[0].mxu0
        %v713 = vadd.f32 0.0, %v712
        %v714 = vpop.f32.mrb[0].mxu0
        %715 = vmatprep.mubr.f32.mxu0 0.0
        %716 = vmatmul.mubr.f32.gmra.mrb[0].mxu0 %v644
        %v717 = vpop.f32.mrb[0].mxu0
        %v718 = vadd.f32 0.0, %v717
        %v719 = vpop.f32.mrb[0].mxu0
        %720 = vdwg.mxu0
        %v721 = vlaneseq
        %v722 = vshrl.u32 %v721, 7
        %v723 = vsub.s32 0, %v722
        %v724 = vrot.slane %v639, %v723
        %725 = vmatprep.subr.mxu0 0.0
        %726 = vmatpush1.msra.mxu0 %v713
        %727 = vmatprep.subr.mxu0 0.0
        %728 = vmatpush1.msra.mxu0 %v718
        %729 = vmatprep.subr.mxu0 0.0
        %730 = vmatpush1.msra.mxu0 0.0
        %731 = vmatprep.subr.mxu0 0.0
        %732 = vmatpush1.msra.mxu0 0.0
        %733 = vmatprep.subr.mxu0 0.0
        %734 = vmatpush1.msra.mxu0 0.0
        %735 = vmatprep.subr.mxu0 0.0
        %736 = vmatpush1.msra.mxu0 0.0
        %737 = vmatprep.subr.mxu0 0.0
        %738 = vmatpush1.msra.mxu0 0.0
        %739 = vmatprep.subr.mxu0 0.0
        %740 = vmatpush1.msra.mxu0 0.0
        %741 = vmatprep.subr.mxu0 0.0
        %742 = vmatpush1.msra.mxu0 0.0
        %743 = vmatprep.subr.mxu0 0.0
        %744 = vmatpush1.msra.mxu0 0.0
        %745 = vmatprep.subr.mxu0 0.0
        %746 = vmatpush1.msra.mxu0 0.0
        %747 = vmatprep.subr.mxu0 0.0
        %748 = vmatpush1.msra.mxu0 0.0
        %749 = vmatprep.subr.mxu0 0.0
        %750 = vmatpush1.msra.mxu0 0.0
        %751 = vmatprep.subr.mxu0 0.0
        %752 = vmatpush1.msra.mxu0 0.0
        %753 = vmatprep.subr.mxu0 0.0
        %754 = vmatpush1.msra.mxu0 0.0
        %755 = vmatprep.subr.mxu0 0.0
        %756 = vmatpush1.msra.mxu0 0.0
        %757 = vmatprep.subr.mxu0 0.0
        %758 = vmatpush1.msra.mxu0 0.0
        %759 = vmatprep.subr.mxu0 0.0
        %760 = vmatpush1.msra.mxu0 0.0
        %761 = vmatprep.subr.mxu0 0.0
        %762 = vmatpush1.msra.mxu0 0.0
        %763 = vmatprep.subr.mxu0 0.0
        %764 = vmatpush1.msra.mxu0 0.0
        %765 = vmatprep.subr.mxu0 0.0
        %766 = vmatpush1.msra.mxu0 0.0
        %767 = vmatprep.subr.mxu0 0.0
        %768 = vmatpush1.msra.mxu0 0.0
        %769 = vmatprep.subr.mxu0 0.0
        %770 = vmatpush1.msra.mxu0 0.0
        %771 = vmatprep.subr.mxu0 0.0
        %772 = vmatpush1.msra.mxu0 0.0
        %773 = vmatprep.subr.mxu0 0.0
        %774 = vmatpush1.msra.mxu0 0.0
        %775 = vmatprep.subr.mxu0 0.0
        %776 = vmatpush1.msra.mxu0 0.0
        %777 = vmatprep.subr.mxu0 0.0
        %778 = vmatpush1.msra.mxu0 0.0
        %779 = vmatprep.subr.mxu0 0.0
        %780 = vmatpush1.msra.mxu0 0.0
        %781 = vmatprep.subr.mxu0 0.0
        %782 = vmatpush1.msra.mxu0 0.0
        %783 = vmatprep.subr.mxu0 0.0
        %784 = vmatpush1.msra.mxu0 0.0
        %785 = vmatprep.subr.mxu0 0.0
        %786 = vmatpush1.msra.mxu0 0.0
        %787 = vmatprep.subr.mxu0 0.0
        %788 = vmatpush1.msra.mxu0 0.0
        %789 = vmatprep.mubr.f32.mxu0 0.0
        %790 = vmatmul.mubr.f32.gmra.mrb[0].mxu0 %v384
        %v791 = vpop.f32.mrb[0].mxu0
        %v792 = vadd.f32 %v724, %v791
        %v793 = vpop.f32.mrb[0].mxu0
        %794 = vmatprep.mubr.f32.mxu0 0.0
        %795 = vmatmul.mubr.f32.gmra.mrb[0].mxu0 %v387
        %v796 = vpop.f32.mrb[0].mxu0
        %v797 = vadd.f32 %v724, %v796
        %v798 = vpop.f32.mrb[0].mxu0
        %799 = vdwg.mxu0
        %v800 = vmax.f32 %v792, 0.0
        %v801 = vmax.f32 %v797, 0.0
        %s802 = scalar_lea.vmem [#allocation6], 96
        %v803 = vld [vmem:[%s802] sm:$0xff]
        %v804 = vld [vmem:[%s802 + $0x8] sm:$0xff]
        %v805 = vld [vmem:[%s802 + $0x10] sm:$0xff]
        %v806 = vld [vmem:[%s802 + $0x18] sm:$0xff]
        %v807 = vld [vmem:[%s3 + $0x5] sm:$0x1]
        %v809 = vsel %vm297, %v800, 0
        %v812 = vsel %vm297, %v801, 0
        %814 = vmatprep.subr.mxu0 0.0
        %815 = vmatpush1.msra.mxu0 %v803
        %816 = vmatprep.subr.mxu0 0.0
        %817 = vmatpush1.msra.mxu0 %v804
        %818 = vmatprep.subr.mxu0 0.0
        %819 = vmatpush1.msra.mxu0 %v805
        %820 = vmatprep.subr.mxu0 0.0
        %821 = vmatpush1.msra.mxu0 %v806
        %822 = vmatprep.subr.mxu0 0.0
        %823 = vmatpush1.msra.mxu0 0.0
        %824 = vmatprep.subr.mxu0 0.0
        %825 = vmatpush1.msra.mxu0 0.0
        %826 = vmatprep.subr.mxu0 0.0
        %827 = vmatpush1.msra.mxu0 0.0
        %828 = vmatprep.subr.mxu0 0.0
        %829 = vmatpush1.msra.mxu0 0.0
        %830 = vmatprep.subr.mxu0 0.0
        %831 = vmatpush1.msra.mxu0 0.0
        %832 = vmatprep.subr.mxu0 0.0
        %833 = vmatpush1.msra.mxu0 0.0
        %834 = vmatprep.subr.mxu0 0.0
        %835 = vmatpush1.msra.mxu0 0.0
        %836 = vmatprep.subr.mxu0 0.0
        %837 = vmatpush1.msra.mxu0 0.0
        %838 = vmatprep.subr.mxu0 0.0
        %839 = vmatpush1.msra.mxu0 0.0
        %840 = vmatprep.subr.mxu0 0.0
        %841 = vmatpush1.msra.mxu0 0.0
        %842 = vmatprep.subr.mxu0 0.0
        %843 = vmatpush1.msra.mxu0 0.0
        %844 = vmatprep.subr.mxu0 0.0
        %845 = vmatpush1.msra.mxu0 0.0
        %846 = vmatprep.subr.mxu0 0.0
        %847 = vmatpush1.msra.mxu0 0.0
        %848 = vmatprep.subr.mxu0 0.0
        %849 = vmatpush1.msra.mxu0 0.0
        %850 = vmatprep.subr.mxu0 0.0
        %851 = vmatpush1.msra.mxu0 0.0
        %852 = vmatprep.subr.mxu0 0.0
        %853 = vmatpush1.msra.mxu0 0.0
        %854 = vmatprep.subr.mxu0 0.0
        %855 = vmatpush1.msra.mxu0 0.0
        %856 = vmatprep.subr.mxu0 0.0
        %857 = vmatpush1.msra.mxu0 0.0
        %858 = vmatprep.subr.mxu0 0.0
        %859 = vmatpush1.msra.mxu0 0.0
        %860 = vmatprep.subr.mxu0 0.0
        %861 = vmatpush1.msra.mxu0 0.0
        %862 = vmatprep.subr.mxu0 0.0
        %863 = vmatpush1.msra.mxu0 0.0
        %864 = vmatprep.subr.mxu0 0.0
        %865 = vmatpush1.msra.mxu0 0.0
        %866 = vmatprep.subr.mxu0 0.0
        %867 = vmatpush1.msra.mxu0 0.0
        %868 = vmatprep.subr.mxu0 0.0
        %869 = vmatpush1.msra.mxu0 0.0
        %870 = vmatprep.subr.mxu0 0.0
        %871 = vmatpush1.msra.mxu0 0.0
        %872 = vmatprep.subr.mxu0 0.0
        %873 = vmatpush1.msra.mxu0 0.0
        %874 = vmatprep.subr.mxu0 0.0
        %875 = vmatpush1.msra.mxu0 0.0
        %876 = vmatprep.subr.mxu0 0.0
        %877 = vmatpush1.msra.mxu0 0.0
        %878 = vmatprep.mubr.f32.mxu0 0.0
        %879 = vmatmul.mubr.f32.gmra.mrb[0].mxu0 %v809
        %v880 = vpop.f32.mrb[0].mxu0
        %v881 = vadd.f32 0.0, %v880
        %v882 = vpop.f32.mrb[0].mxu0
        %883 = vmatprep.mubr.f32.mxu0 0.0
        %884 = vmatmul.mubr.f32.gmra.mrb[0].mxu0 %v812
        %v885 = vpop.f32.mrb[0].mxu0
        %v886 = vadd.f32 0.0, %v885
        %v887 = vpop.f32.mrb[0].mxu0
        %888 = vdwg.mxu0
        %v889 = vlaneseq
        %v890 = vshrl.u32 %v889, 7
        %v891 = vsub.s32 0, %v890
        %v892 = vrot.slane %v807, %v891
        %893 = vmatprep.subr.mxu0 0.0
        %894 = vmatpush1.msra.mxu0 %v881
        %895 = vmatprep.subr.mxu0 0.0
        %896 = vmatpush1.msra.mxu0 %v886
        %897 = vmatprep.subr.mxu0 0.0
        %898 = vmatpush1.msra.mxu0 0.0
        %899 = vmatprep.subr.mxu0 0.0
        %900 = vmatpush1.msra.mxu0 0.0
        %901 = vmatprep.subr.mxu0 0.0
        %902 = vmatpush1.msra.mxu0 0.0
        %903 = vmatprep.subr.mxu0 0.0
        %904 = vmatpush1.msra.mxu0 0.0
        %905 = vmatprep.subr.mxu0 0.0
        %906 = vmatpush1.msra.mxu0 0.0
        %907 = vmatprep.subr.mxu0 0.0
        %908 = vmatpush1.msra.mxu0 0.0
        %909 = vmatprep.subr.mxu0 0.0
        %910 = vmatpush1.msra.mxu0 0.0
        %911 = vmatprep.subr.mxu0 0.0
        %912 = vmatpush1.msra.mxu0 0.0
        %913 = vmatprep.subr.mxu0 0.0
        %914 = vmatpush1.msra.mxu0 0.0
        %915 = vmatprep.subr.mxu0 0.0
        %916 = vmatpush1.msra.mxu0 0.0
        %917 = vmatprep.subr.mxu0 0.0
        %918 = vmatpush1.msra.mxu0 0.0
        %919 = vmatprep.subr.mxu0 0.0
        %920 = vmatpush1.msra.mxu0 0.0
        %921 = vmatprep.subr.mxu0 0.0
        %922 = vmatpush1.msra.mxu0 0.0
        %923 = vmatprep.subr.mxu0 0.0
        %924 = vmatpush1.msra.mxu0 0.0
        %925 = vmatprep.subr.mxu0 0.0
        %926 = vmatpush1.msra.mxu0 0.0
        %927 = vmatprep.subr.mxu0 0.0
        %928 = vmatpush1.msra.mxu0 0.0
        %929 = vmatprep.subr.mxu0 0.0
        %930 = vmatpush1.msra.mxu0 0.0
        %931 = vmatprep.subr.mxu0 0.0
        %932 = vmatpush1.msra.mxu0 0.0
        %933 = vmatprep.subr.mxu0 0.0
        %934 = vmatpush1.msra.mxu0 0.0
        %935 = vmatprep.subr.mxu0 0.0
        %936 = vmatpush1.msra.mxu0 0.0
        %937 = vmatprep.subr.mxu0 0.0
        %938 = vmatpush1.msra.mxu0 0.0
        %939 = vmatprep.subr.mxu0 0.0
        %940 = vmatpush1.msra.mxu0 0.0
        %941 = vmatprep.subr.mxu0 0.0
        %942 = vmatpush1.msra.mxu0 0.0
        %943 = vmatprep.subr.mxu0 0.0
        %944 = vmatpush1.msra.mxu0 0.0
        %945 = vmatprep.subr.mxu0 0.0
        %946 = vmatpush1.msra.mxu0 0.0
        %947 = vmatprep.subr.mxu0 0.0
        %948 = vmatpush1.msra.mxu0 0.0
        %949 = vmatprep.subr.mxu0 0.0
        %950 = vmatpush1.msra.mxu0 0.0
        %951 = vmatprep.subr.mxu0 0.0
        %952 = vmatpush1.msra.mxu0 0.0
        %953 = vmatprep.subr.mxu0 0.0
        %954 = vmatpush1.msra.mxu0 0.0
        %955 = vmatprep.subr.mxu0 0.0
        %956 = vmatpush1.msra.mxu0 0.0
        %957 = vmatprep.mubr.f32.mxu0 0.0
        %958 = vmatmul.mubr.f32.gmra.mrb[0].mxu0 %v384
        %v959 = vpop.f32.mrb[0].mxu0
        %v960 = vadd.f32 %v892, %v959
        %v961 = vpop.f32.mrb[0].mxu0
        %962 = vmatprep.mubr.f32.mxu0 0.0
        %963 = vmatmul.mubr.f32.gmra.mrb[0].mxu0 %v387
        %v964 = vpop.f32.mrb[0].mxu0
        %v965 = vadd.f32 %v892, %v964
        %v966 = vpop.f32.mrb[0].mxu0
        %967 = vdwg.mxu0
        %v968 = vmax.f32 %v960, 0.0
        %v969 = vmax.f32 %v965, 0.0
        %v970 = vld [vmem:[%s3 + $0x6] sm:$0x1]
        %v971 = vlaneseq
        %v972 = vshrl.u32 %v971, 7
        %v973 = vsub.s32 0, %v972
        %v974 = vrot.slane %v970, %v973
        %v975 = vmul.f32 %v968, %v974
        %v976 = vmul.f32 %v969, %v974
        %v977 = vsel %vm297, %v975, 0.0
        %978 = vadd.xlane.f32.xlu0 %v977
        %v979 = vpop.xlane.xlu0 %978
        %v980 = vsel %vm297, %v976, 0.0
        %981 = vadd.xlane.f32.xlu0 %v980
        %v982 = vpop.xlane.xlu0 %981
        %v983 = vld [vmem:[%s230] sm:$0x3]
        %v984 = vld [vmem:[%s3 + $0x7] sm:$0x1]
        %v985 = vlaneseq
        %v986 = vshrl.u32 %v985, 7
        %v987 = vsub.s32 0, %v986
        %v988 = vrot.slane %v984, %v987
        %v990 = vsel %vm269, %v983, 0
        %992 = vmatprep.subr.mxu0 0.0
        %993 = vmatpush1.msra.mxu0 %v979
        %994 = vmatprep.subr.mxu0 0.0
        %995 = vmatpush1.msra.mxu0 %v982
        %996 = vmatprep.subr.mxu0 0.0
        %997 = vmatpush1.msra.mxu0 0.0
        %998 = vmatprep.subr.mxu0 0.0
        %999 = vmatpush1.msra.mxu0 0.0
        %1000 = vmatprep.subr.mxu0 0.0
        %1001 = vmatpush1.msra.mxu0 0.0
        %1002 = vmatprep.subr.mxu0 0.0
        %1003 = vmatpush1.msra.mxu0 0.0
        %1004 = vmatprep.subr.mxu0 0.0
        %1005 = vmatpush1.msra.mxu0 0.0
        %1006 = vmatprep.subr.mxu0 0.0
        %1007 = vmatpush1.msra.mxu0 0.0
        %1008 = vmatprep.subr.mxu0 0.0
        %1009 = vmatpush1.msra.mxu0 0.0
        %1010 = vmatprep.subr.mxu0 0.0
        %1011 = vmatpush1.msra.mxu0 0.0
        %1012 = vmatprep.subr.mxu0 0.0
        %1013 = vmatpush1.msra.mxu0 0.0
        %1014 = vmatprep.subr.mxu0 0.0
        %1015 = vmatpush1.msra.mxu0 0.0
        %1016 = vmatprep.subr.mxu0 0.0
        %1017 = vmatpush1.msra.mxu0 0.0
        %1018 = vmatprep.subr.mxu0 0.0
        %1019 = vmatpush1.msra.mxu0 0.0
        %1020 = vmatprep.subr.mxu0 0.0
        %1021 = vmatpush1.msra.mxu0 0.0
        %1022 = vmatprep.subr.mxu0 0.0
        %1023 = vmatpush1.msra.mxu0 0.0
        %1024 = vmatprep.subr.mxu0 0.0
        %1025 = vmatpush1.msra.mxu0 0.0
        %1026 = vmatprep.subr.mxu0 0.0
        %1027 = vmatpush1.msra.mxu0 0.0
        %1028 = vmatprep.subr.mxu0 0.0
        %1029 = vmatpush1.msra.mxu0 0.0
        %1030 = vmatprep.subr.mxu0 0.0
        %1031 = vmatpush1.msra.mxu0 0.0
        %1032 = vmatprep.subr.mxu0 0.0
        %1033 = vmatpush1.msra.mxu0 0.0
        %1034 = vmatprep.subr.mxu0 0.0
        %1035 = vmatpush1.msra.mxu0 0.0
        %1036 = vmatprep.subr.mxu0 0.0
        %1037 = vmatpush1.msra.mxu0 0.0
        %1038 = vmatprep.subr.mxu0 0.0
        %1039 = vmatpush1.msra.mxu0 0.0
        %1040 = vmatprep.subr.mxu0 0.0
        %1041 = vmatpush1.msra.mxu0 0.0
        %1042 = vmatprep.subr.mxu0 0.0
        %1043 = vmatpush1.msra.mxu0 0.0
        %1044 = vmatprep.subr.mxu0 0.0
        %1045 = vmatpush1.msra.mxu0 0.0
        %1046 = vmatprep.subr.mxu0 0.0
        %1047 = vmatpush1.msra.mxu0 0.0
        %1048 = vmatprep.subr.mxu0 0.0
        %1049 = vmatpush1.msra.mxu0 0.0
        %1050 = vmatprep.subr.mxu0 0.0
        %1051 = vmatpush1.msra.mxu0 0.0
        %1052 = vmatprep.subr.mxu0 0.0
        %1053 = vmatpush1.msra.mxu0 0.0
        %1054 = vmatprep.subr.mxu0 0.0
        %1055 = vmatpush1.msra.mxu0 0.0
        %1056 = vmatprep.mubr.f32.mxu0 0.0
        %1057 = vmatmul.mubr.f32.gmra.mrb[0].mxu0 %v990
        %v1058 = vpop.f32.mrb[0].mxu0
        %v1059 = vadd.f32 %v988, %v1058
        %v1060 = vpop.f32.mrb[0].mxu0
        %1061 = vdwg.mxu0
        %vm1062 = vcmask 1024
        %1063 = vst.msk [vmem:[%s266] sm:$0x3] %vm1062, %v1059
        %p1064 = scmp.lt.s32.totalorder %s21, 1
        %s1065 = scalar_select %p1064, %s21, 1
        %s1066 = smul.addr %s1065, 2
        %s1067 = scalar_lea.vmem %s4, %s1066
        // Predicated region
        $region49: #{tpu_custom_call.1} parent=35 // pred_check
          %p1068 = pneg %p133
        $region50: #{tpu_custom_call.1} parent=35 // pred_check_branch
          %1070 = sbr.rel (%p1068) target = $region52
        $region51: #{tpu_custom_call.1} parent=35 // pred_region
          _
        $region52: #{tpu_custom_call.1} parent=35 // pred_fallthru
          _
      $region36: #{tpu_custom_call.1} parent=5 // pred_fallthru
        _
      %p1071 = scmp.le.s32.totalorder 2, %s16
      // Predicated region
      $region53: #{tpu_custom_call.1} parent=5 // pred_check
        %p1072 = pneg %p1071
      $region54: #{tpu_custom_call.1} parent=5 // pred_check_branch
        %1074 = sbr.rel (%p1072) target = $region56
      $region55: #{tpu_custom_call.1} parent=5 // pred_region
        %s1075 = ssub.s32 %s16, 2
        // Predicated region
        $region57: #{tpu_custom_call.1} parent=55 // pred_check
          %p1076 = pneg %p139
        $region58: #{tpu_custom_call.1} parent=55 // pred_check_branch
          %1078 = sbr.rel (%p1076) target = $region60
        $region59: #{tpu_custom_call.1} parent=55 // pred_region
          %p1079 = scmp.lt.s32.totalorder %s22, 1
          %s1080 = scalar_select %p1079, %s22, 1
          %s1081 = smul.addr %s1080, 2
          %s1082 = scalar_lea.vmem %s4, %s1081
        $region60: #{tpu_custom_call.1} parent=55 // pred_fallthru
          _
      $region56: #{tpu_custom_call.1} parent=5 // pred_fallthru
        _
    $region6: #{tpu_custom_call.1} parent=1 // loop_footer
      %s20 = sadd.s32 1, %s16
    $region7: #{tpu_custom_call.1} parent=1 // loop_footer_branch
      %15 = sbr.rel target = $region3
    $region8: #{tpu_custom_call.1} parent=1 // loop_exit
      _
    %1083 = vsyncpa [#allocation3], 1
    %s1084 = scalar_lea.sflag [#allocation3], 1
    %1085 = vsyncpa %s1084, 1
    %1086 = vsyncpa [#allocation5], 1
    %s1087 = scalar_lea.sflag [#allocation5], 1
    %1088 = vsyncpa %s1087, 1

</llo_original>
